<compile_context>
chip_gen: v7x
topology: tpu7x:2x2x1
jax: 0.10.0
libtpu: 0.0.40
codegen_flags: <defaults>
</compile_context>

<pallas_src>
import functools

import jax
import jax.numpy as jnp
from jax.experimental import pallas as pl
from jax.experimental.pallas import tpu as pltpu


def _linear_kernel(x_ref, w_ref, b_ref, o_ref):
    # x_ref: (1, N) f32, w_ref: (N, Hp) f32, b_ref: (1, Hp) f32, o_ref: (1, Hp) f32
    # Single MXU matvec + VPU bias add; output lane dim (Hp) is 128-dense.
    o_ref[...] = (
        jnp.dot(x_ref[...], w_ref[...], preferred_element_type=jnp.float32)
        + b_ref[...]
    )


def prepare_linear_params(weight, bias, lane=128):
    """One-time parameter prep (init-time, NOT per forward call).

    weight: (out_features, in_features)  ->  (in_features, H_pad) f32, lane-padded
    bias:   (out_features,)              ->  (1, H_pad) f32, lane-padded
    """
    out_features, in_features = weight.shape
    h_pad = ((out_features + lane - 1) // lane) * lane
    w_t = jnp.transpose(weight).astype(jnp.float32)                 # (N, H)
    w_t = jnp.pad(w_t, ((0, 0), (0, h_pad - out_features)))         # (N, H_pad)
    b_row = jnp.pad(bias.astype(jnp.float32),
                    (0, h_pad - out_features)).reshape(1, h_pad)    # (1, H_pad)
    return w_t, b_row


@functools.partial(jax.jit, static_argnums=(3,))
def flatten_linear_forward(x, w_prepared, b_prepared, out_features):
    """FlattenModule.forward with an inner Linear module.

    x is flattened to 1-D (row-major, == torch.flatten) and multiplied by the
    pre-transposed, lane-padded weight inside a single no-grid Pallas kernel.
    Returns a 1-D array of shape (out_features,).
    """
    in_features, h_pad = w_prepared.shape
    if x.size != in_features:
        raise ValueError(f"flatten(x) has {x.size} elements, expected {in_features}")

    # torch.flatten(x): row-major flatten -> 1-D, viewed as a (1, N) row (free).
    x_flat = jnp.reshape(x, (1, in_features)).astype(jnp.float32)

    out = pl.pallas_call(
        _linear_kernel,
        out_shape=jax.ShapeDtypeStruct((1, h_pad), jnp.float32),
        # No grid: whole arrays live in VMEM for the single kernel invocation
        # (total working set ~1.1 MiB f32 — far under any generation's VMEM).
        in_specs=[
            pl.BlockSpec(memory_space=pltpu.MemorySpace.VMEM),  # x_flat (1, N)
            pl.BlockSpec(memory_space=pltpu.MemorySpace.VMEM),  # weight (N, H_pad)
            pl.BlockSpec(memory_space=pltpu.MemorySpace.VMEM),  # bias   (1, H_pad)
        ],
        out_specs=pl.BlockSpec(memory_space=pltpu.MemorySpace.VMEM),
    )(x_flat, w_prepared, b_prepared)

    # Slice the lane padding back off (tiny, 512 B).
    return out[0, :out_features]


if __name__ == "__main__":
    # Example input consistent with an NCHW conv-style tensor.
    B, C, H, W = 2, 4, 16, 16
    HIDDEN = 32
    N = B * C * H * W  # 2048 = in_features of the inner Linear after flatten

    key = jax.random.PRNGKey(0)
    kx, kw, kb = jax.random.split(key, 3)

    x = jax.random.normal(kx, (B, C, H, W), dtype=jnp.float32)
    # Deterministic synthetic parameters for the inner Linear(in=N, out=HIDDEN).
    weight = jax.random.normal(kw, (HIDDEN, N), dtype=jnp.float32) * 0.02
    bias = jax.random.normal(kb, (HIDDEN,), dtype=jnp.float32) * 0.1

    # One-time parameter prep (transpose + lane-pad + cast), outside the hot path.
    w_prep, b_prep = prepare_linear_params(weight, bias)

    y = flatten_linear_forward(x, w_prep, b_prep, HIDDEN)
    y = jax.block_until_ready(y)

    # Reference check against plain JAX (same semantics as torch.flatten + Linear).
    y_ref = weight @ jnp.reshape(x, (-1,)) + bias
    assert y.shape == (HIDDEN,)
    assert jnp.allclose(y, y_ref, atol=1e-4, rtol=1e-4)

    print("KERNEL_OK")
</pallas_src>

<mosaic_0001>
module attributes {stable_mosaic.version = 11 : i64} {
  func.func @_linear_kernel(%arg0: memref<1x2048xf32, #tpu.memory_space<vmem>>, %arg1: memref<2048x128xf32, #tpu.memory_space<vmem>>, %arg2: memref<1x128xf32, #tpu.memory_space<vmem>>, %arg3: memref<1x128xf32, #tpu.memory_space<vmem>>) attributes {dimension_semantics = [], scalar_prefetch = 0 : i64, scratch_operands = 0 : i64, tpu.core_type = #tpu.core_type<tc>} {
    %c0 = arith.constant 0 : index
    %c0_0 = arith.constant 0 : index
    %0 = vector.load %arg0[%c0, %c0_0] : memref<1x2048xf32, #tpu.memory_space<vmem>>, vector<1x2048xf32>
    %c0_1 = arith.constant 0 : index
    %c0_2 = arith.constant 0 : index
    %1 = vector.load %arg1[%c0_1, %c0_2] : memref<2048x128xf32, #tpu.memory_space<vmem>>, vector<2048x128xf32>
    %cst = arith.constant dense<0.000000e+00> : vector<1x128xf32>
    %2 = tpu.matmul %0, %1, %cst {dimension_numbers = #tpu.dot_dimension_numbers<[1], [0], [0], [1], [0, 0, 1, 1], [], []>} : vector<1x2048xf32>, vector<2048x128xf32>, vector<1x128xf32> -> vector<1x128xf32>
    %c0_3 = arith.constant 0 : index
    %c0_4 = arith.constant 0 : index
    %3 = vector.load %arg2[%c0_3, %c0_4] : memref<1x128xf32, #tpu.memory_space<vmem>>, vector<1x128xf32>
    %4 = arith.addf %2, %3 : vector<1x128xf32>
    %c0_5 = arith.constant 0 : index
    %c0_6 = arith.constant 0 : index
    %5 = vector.load %arg3[%c0_5, %c0_6] : memref<1x128xf32, #tpu.memory_space<vmem>>, vector<1x128xf32>
    tpu.vector_store %arg3[%c0_5, %c0_6], %4 {strides = array<i32>} : memref<1x128xf32, #tpu.memory_space<vmem>>, vector<1x128xf32>,
    return
  }
}

</mosaic_0001>

<llo_original>
// kernel: flatten_linear_forward.1
$region0: #{flatten_linear_forward.1}
  #allocation0 [shape = 'u32[]', space=smem, size = 0x4, offset = 0x4, fixed_abs, tag = 'smem constant byte address 0x4 - core index']
  #allocation1 [shape = 'u32[144,128]{1,0:T(1,128)}', space=vmem, size = 0x12000, scoped, tag = 'internal scratch']
  %s0 = inlined_call_operand.vmem [shape: f32[1,2048], index: 0, kind: input, shape index: {}]
  %s1 = inlined_call_operand.hbm [shape: f32[2048,128], index: 1, kind: input, shape index: {}]
  %s2 = inlined_call_operand.vmem [shape: f32[1,128], index: 2, kind: input, shape index: {}]
  %s3 = inlined_call_operand.vmem [shape: f32[1,128], index: 3, kind: output, shape index: {}]
  %s4 = sld [smem:[#allocation0]]
  $region26: #{flatten_linear_forward.1} parent=0
    _
  %s6 = ssub.s32 1, %s4
  %s7 = scalar_select 0, %s6, %s4
  $region1: #{flatten_linear_forward.1} parent=0
    #allocation2 [shape = 'u8[1048576]{0}', space=vmem, size = 0x100000, scoped, tag = 'input window, operand 1, single buffered']
    #allocation3 [shape = 's32[1]{0}', space=sflag, size = 0x4, scoped, tag = 'scoped memory for flatten_linear_forward.1']
    %8 = vsyncpa [#allocation3], 0
    // Predicated region
    $region2: #{flatten_linear_forward.1} parent=1 // pred_check
      _
    $region3: #{flatten_linear_forward.1} parent=1 // pred_check_branch
      %10 = sbr.rel (0) target = $region5
    $region4: #{flatten_linear_forward.1} parent=1 // pred_region
      _
    $region5: #{flatten_linear_forward.1} parent=1 // pred_fallthru
      _
    // Predicated region
    $region6: #{flatten_linear_forward.1} parent=1 // pred_check
      _
    $region7: #{flatten_linear_forward.1} parent=1 // pred_check_branch
      %12 = sbr.rel (0) target = $region9
    $region8: #{flatten_linear_forward.1} parent=1 // pred_region
      %s14 = ssub.s32 32768, 32768
      %15 = vsyncadd [#allocation3], %s14
      %s16 = sshll.u32 [#allocation2], 4
      %s17 = int_to_ptr.vmem [resolvable:$true] %s16
      %22 = dma.hbm_to_vmem [thread:$0]  %s1, 32768, %s17, [#allocation3], 128, 128, 8
    $region9: #{flatten_linear_forward.1} parent=1 // pred_fallthru
      _
    // Predicated region
    $region10: #{flatten_linear_forward.1} parent=1 // pred_check
      _
    $region11: #{flatten_linear_forward.1} parent=1 // pred_check_branch
      %24 = sbr.rel (0) target = $region13
    $region12: #{flatten_linear_forward.1} parent=1 // pred_region
      _
    $region13: #{flatten_linear_forward.1} parent=1 // pred_fallthru
      _
    // Predicated region
    $region14: #{flatten_linear_forward.1} parent=1 // pred_check
      _
    $region15: #{flatten_linear_forward.1} parent=1 // pred_check_branch
      %26 = sbr.rel (0) target = $region17
    $region16: #{flatten_linear_forward.1} parent=1 // pred_region
      %27 = dma.done [#allocation3], 32768
    $region17: #{flatten_linear_forward.1} parent=1 // pred_fallthru
      _
    %v28 = vld [vmem:[%s0] sm:$0xff]
    %v29 = vld [vmem:[%s0 + $0x8] sm:$0xff]
    %v30 = vld [vmem:[#allocation2] sm:$0xff]
    %v31 = vld [vmem:[#allocation2 + $0x8] sm:$0xff]
    %v32 = vld [vmem:[#allocation2 + $0x10] sm:$0xff]
    %v33 = vld [vmem:[#allocation2 + $0x18] sm:$0xff]
    %v34 = vld [vmem:[#allocation2 + $0x20] sm:$0xff]
    %v35 = vld [vmem:[#allocation2 + $0x28] sm:$0xff]
    %v36 = vld [vmem:[#allocation2 + $0x30] sm:$0xff]
    %v37 = vld [vmem:[#allocation2 + $0x38] sm:$0xff]
    %v38 = vld [vmem:[#allocation2 + $0x40] sm:$0xff]
    %v39 = vld [vmem:[#allocation2 + $0x48] sm:$0xff]
    %v40 = vld [vmem:[#allocation2 + $0x50] sm:$0xff]
    %v41 = vld [vmem:[#allocation2 + $0x58] sm:$0xff]
    %v42 = vld [vmem:[#allocation2 + $0x60] sm:$0xff]
    %v43 = vld [vmem:[#allocation2 + $0x68] sm:$0xff]
    %v44 = vld [vmem:[#allocation2 + $0x70] sm:$0xff]
    %v45 = vld [vmem:[#allocation2 + $0x78] sm:$0xff]
    %v46 = vld [vmem:[#allocation2 + $0x80] sm:$0xff]
    %v47 = vld [vmem:[#allocation2 + $0x88] sm:$0xff]
    %v48 = vld [vmem:[#allocation2 + $0x90] sm:$0xff]
    %v49 = vld [vmem:[#allocation2 + $0x98] sm:$0xff]
    %v50 = vld [vmem:[#allocation2 + $0xa0] sm:$0xff]
    %v51 = vld [vmem:[#allocation2 + $0xa8] sm:$0xff]
    %v52 = vld [vmem:[#allocation2 + $0xb0] sm:$0xff]
    %v53 = vld [vmem:[#allocation2 + $0xb8] sm:$0xff]
    %v54 = vld [vmem:[#allocation2 + $0xc0] sm:$0xff]
    %v55 = vld [vmem:[#allocation2 + $0xc8] sm:$0xff]
    %v56 = vld [vmem:[#allocation2 + $0xd0] sm:$0xff]
    %v57 = vld [vmem:[#allocation2 + $0xd8] sm:$0xff]
    %v58 = vld [vmem:[#allocation2 + $0xe0] sm:$0xff]
    %v59 = vld [vmem:[#allocation2 + $0xe8] sm:$0xff]
    %v60 = vld [vmem:[#allocation2 + $0xf0] sm:$0xff]
    %v61 = vld [vmem:[#allocation2 + $0xf8] sm:$0xff]
    %v62 = vld [vmem:[#allocation2 + $0x100] sm:$0xff]
    %v63 = vld [vmem:[#allocation2 + $0x108] sm:$0xff]
    %v64 = vld [vmem:[#allocation2 + $0x110] sm:$0xff]
    %v65 = vld [vmem:[#allocation2 + $0x118] sm:$0xff]
    %v66 = vld [vmem:[#allocation2 + $0x120] sm:$0xff]
    %v67 = vld [vmem:[#allocation2 + $0x128] sm:$0xff]
    %v68 = vld [vmem:[#allocation2 + $0x130] sm:$0xff]
    %v69 = vld [vmem:[#allocation2 + $0x138] sm:$0xff]
    %v70 = vld [vmem:[#allocation2 + $0x140] sm:$0xff]
    %v71 = vld [vmem:[#allocation2 + $0x148] sm:$0xff]
    %v72 = vld [vmem:[#allocation2 + $0x150] sm:$0xff]
    %v73 = vld [vmem:[#allocation2 + $0x158] sm:$0xff]
    %v74 = vld [vmem:[#allocation2 + $0x160] sm:$0xff]
    %v75 = vld [vmem:[#allocation2 + $0x168] sm:$0xff]
    %v76 = vld [vmem:[#allocation2 + $0x170] sm:$0xff]
    %v77 = vld [vmem:[#allocation2 + $0x178] sm:$0xff]
    %v78 = vld [vmem:[#allocation2 + $0x180] sm:$0xff]
    %v79 = vld [vmem:[#allocation2 + $0x188] sm:$0xff]
    %v80 = vld [vmem:[#allocation2 + $0x190] sm:$0xff]
    %v81 = vld [vmem:[#allocation2 + $0x198] sm:$0xff]
    %v82 = vld [vmem:[#allocation2 + $0x1a0] sm:$0xff]
    %v83 = vld [vmem:[#allocation2 + $0x1a8] sm:$0xff]
    %v84 = vld [vmem:[#allocation2 + $0x1b0] sm:$0xff]
    %v85 = vld [vmem:[#allocation2 + $0x1b8] sm:$0xff]
    %v86 = vld [vmem:[#allocation2 + $0x1c0] sm:$0xff]
    %v87 = vld [vmem:[#allocation2 + $0x1c8] sm:$0xff]
    %v88 = vld [vmem:[#allocation2 + $0x1d0] sm:$0xff]
    %v89 = vld [vmem:[#allocation2 + $0x1d8] sm:$0xff]
    %v90 = vld [vmem:[#allocation2 + $0x1e0] sm:$0xff]
    %v91 = vld [vmem:[#allocation2 + $0x1e8] sm:$0xff]
    %v92 = vld [vmem:[#allocation2 + $0x1f0] sm:$0xff]
    %v93 = vld [vmem:[#allocation2 + $0x1f8] sm:$0xff]
    %v94 = vld [vmem:[#allocation2 + $0x200] sm:$0xff]
    %v95 = vld [vmem:[#allocation2 + $0x208] sm:$0xff]
    %v96 = vld [vmem:[#allocation2 + $0x210] sm:$0xff]
    %v97 = vld [vmem:[#allocation2 + $0x218] sm:$0xff]
    %v98 = vld [vmem:[#allocation2 + $0x220] sm:$0xff]
    %v99 = vld [vmem:[#allocation2 + $0x228] sm:$0xff]
    %v100 = vld [vmem:[#allocation2 + $0x230] sm:$0xff]
    %v101 = vld [vmem:[#allocation2 + $0x238] sm:$0xff]
    %v102 = vld [vmem:[#allocation2 + $0x240] sm:$0xff]
    %v103 = vld [vmem:[#allocation2 + $0x248] sm:$0xff]
    %v104 = vld [vmem:[#allocation2 + $0x250] sm:$0xff]
    %v105 = vld [vmem:[#allocation2 + $0x258] sm:$0xff]
    %v106 = vld [vmem:[#allocation2 + $0x260] sm:$0xff]
    %v107 = vld [vmem:[#allocation2 + $0x268] sm:$0xff]
    %v108 = vld [vmem:[#allocation2 + $0x270] sm:$0xff]
    %v109 = vld [vmem:[#allocation2 + $0x278] sm:$0xff]
    %v110 = vld [vmem:[#allocation2 + $0x280] sm:$0xff]
    %v111 = vld [vmem:[#allocation2 + $0x288] sm:$0xff]
    %v112 = vld [vmem:[#allocation2 + $0x290] sm:$0xff]
    %v113 = vld [vmem:[#allocation2 + $0x298] sm:$0xff]
    %v114 = vld [vmem:[#allocation2 + $0x2a0] sm:$0xff]
    %v115 = vld [vmem:[#allocation2 + $0x2a8] sm:$0xff]
    %v116 = vld [vmem:[#allocation2 + $0x2b0] sm:$0xff]
    %v117 = vld [vmem:[#allocation2 + $0x2b8] sm:$0xff]
    %v118 = vld [vmem:[#allocation2 + $0x2c0] sm:$0xff]
    %v119 = vld [vmem:[#allocation2 + $0x2c8] sm:$0xff]
    %v120 = vld [vmem:[#allocation2 + $0x2d0] sm:$0xff]
    %v121 = vld [vmem:[#allocation2 + $0x2d8] sm:$0xff]
    %v122 = vld [vmem:[#allocation2 + $0x2e0] sm:$0xff]
    %v123 = vld [vmem:[#allocation2 + $0x2e8] sm:$0xff]
    %v124 = vld [vmem:[#allocation2 + $0x2f0] sm:$0xff]
    %v125 = vld [vmem:[#allocation2 + $0x2f8] sm:$0xff]
    %v126 = vld [vmem:[#allocation2 + $0x300] sm:$0xff]
    %v127 = vld [vmem:[#allocation2 + $0x308] sm:$0xff]
    %v128 = vld [vmem:[#allocation2 + $0x310] sm:$0xff]
    %v129 = vld [vmem:[#allocation2 + $0x318] sm:$0xff]
    %v130 = vld [vmem:[#allocation2 + $0x320] sm:$0xff]
    %v131 = vld [vmem:[#allocation2 + $0x328] sm:$0xff]
    %v132 = vld [vmem:[#allocation2 + $0x330] sm:$0xff]
    %v133 = vld [vmem:[#allocation2 + $0x338] sm:$0xff]
    %v134 = vld [vmem:[#allocation2 + $0x340] sm:$0xff]
    %v135 = vld [vmem:[#allocation2 + $0x348] sm:$0xff]
    %v136 = vld [vmem:[#allocation2 + $0x350] sm:$0xff]
    %v137 = vld [vmem:[#allocation2 + $0x358] sm:$0xff]
    %v138 = vld [vmem:[#allocation2 + $0x360] sm:$0xff]
    %v139 = vld [vmem:[#allocation2 + $0x368] sm:$0xff]
    %v140 = vld [vmem:[#allocation2 + $0x370] sm:$0xff]
    %v141 = vld [vmem:[#allocation2 + $0x378] sm:$0xff]
    %v142 = vld [vmem:[#allocation2 + $0x380] sm:$0xff]
    %v143 = vld [vmem:[#allocation2 + $0x388] sm:$0xff]
    %v144 = vld [vmem:[#allocation2 + $0x390] sm:$0xff]
    %v145 = vld [vmem:[#allocation2 + $0x398] sm:$0xff]
    %v146 = vld [vmem:[#allocation2 + $0x3a0] sm:$0xff]
    %v147 = vld [vmem:[#allocation2 + $0x3a8] sm:$0xff]
    %v148 = vld [vmem:[#allocation2 + $0x3b0] sm:$0xff]
    %v149 = vld [vmem:[#allocation2 + $0x3b8] sm:$0xff]
    %v150 = vld [vmem:[#allocation2 + $0x3c0] sm:$0xff]
    %v151 = vld [vmem:[#allocation2 + $0x3c8] sm:$0xff]
    %v152 = vld [vmem:[#allocation2 + $0x3d0] sm:$0xff]
    %v153 = vld [vmem:[#allocation2 + $0x3d8] sm:$0xff]
    %v154 = vld [vmem:[#allocation2 + $0x3e0] sm:$0xff]
    %v155 = vld [vmem:[#allocation2 + $0x3e8] sm:$0xff]
    %v156 = vld [vmem:[#allocation2 + $0x3f0] sm:$0xff]
    %v157 = vld [vmem:[#allocation2 + $0x3f8] sm:$0xff]
    %v158 = vld [vmem:[#allocation2 + $0x400] sm:$0xff]
    %v159 = vld [vmem:[#allocation2 + $0x408] sm:$0xff]
    %v160 = vld [vmem:[#allocation2 + $0x410] sm:$0xff]
    %v161 = vld [vmem:[#allocation2 + $0x418] sm:$0xff]
    %v162 = vld [vmem:[#allocation2 + $0x420] sm:$0xff]
    %v163 = vld [vmem:[#allocation2 + $0x428] sm:$0xff]
    %v164 = vld [vmem:[#allocation2 + $0x430] sm:$0xff]
    %v165 = vld [vmem:[#allocation2 + $0x438] sm:$0xff]
    %v166 = vld [vmem:[#allocation2 + $0x440] sm:$0xff]
    %v167 = vld [vmem:[#allocation2 + $0x448] sm:$0xff]
    %v168 = vld [vmem:[#allocation2 + $0x450] sm:$0xff]
    %v169 = vld [vmem:[#allocation2 + $0x458] sm:$0xff]
    %v170 = vld [vmem:[#allocation2 + $0x460] sm:$0xff]
    %v171 = vld [vmem:[#allocation2 + $0x468] sm:$0xff]
    %v172 = vld [vmem:[#allocation2 + $0x470] sm:$0xff]
    %v173 = vld [vmem:[#allocation2 + $0x478] sm:$0xff]
    %v174 = vld [vmem:[#allocation2 + $0x480] sm:$0xff]
    %v175 = vld [vmem:[#allocation2 + $0x488] sm:$0xff]
    %v176 = vld [vmem:[#allocation2 + $0x490] sm:$0xff]
    %v177 = vld [vmem:[#allocation2 + $0x498] sm:$0xff]
    %v178 = vld [vmem:[#allocation2 + $0x4a0] sm:$0xff]
    %v179 = vld [vmem:[#allocation2 + $0x4a8] sm:$0xff]
    %v180 = vld [vmem:[#allocation2 + $0x4b0] sm:$0xff]
    %v181 = vld [vmem:[#allocation2 + $0x4b8] sm:$0xff]
    %v182 = vld [vmem:[#allocation2 + $0x4c0] sm:$0xff]
    %v183 = vld [vmem:[#allocation2 + $0x4c8] sm:$0xff]
    %v184 = vld [vmem:[#allocation2 + $0x4d0] sm:$0xff]
    %v185 = vld [vmem:[#allocation2 + $0x4d8] sm:$0xff]
    %v186 = vld [vmem:[#allocation2 + $0x4e0] sm:$0xff]
    %v187 = vld [vmem:[#allocation2 + $0x4e8] sm:$0xff]
    %v188 = vld [vmem:[#allocation2 + $0x4f0] sm:$0xff]
    %v189 = vld [vmem:[#allocation2 + $0x4f8] sm:$0xff]
    %v190 = vld [vmem:[#allocation2 + $0x500] sm:$0xff]
    %v191 = vld [vmem:[#allocation2 + $0x508] sm:$0xff]
    %v192 = vld [vmem:[#allocation2 + $0x510] sm:$0xff]
    %v193 = vld [vmem:[#allocation2 + $0x518] sm:$0xff]
    %v194 = vld [vmem:[#allocation2 + $0x520] sm:$0xff]
    %v195 = vld [vmem:[#allocation2 + $0x528] sm:$0xff]
    %v196 = vld [vmem:[#allocation2 + $0x530] sm:$0xff]
    %v197 = vld [vmem:[#allocation2 + $0x538] sm:$0xff]
    %v198 = vld [vmem:[#allocation2 + $0x540] sm:$0xff]
    %v199 = vld [vmem:[#allocation2 + $0x548] sm:$0xff]
    %v200 = vld [vmem:[#allocation2 + $0x550] sm:$0xff]
    %v201 = vld [vmem:[#allocation2 + $0x558] sm:$0xff]
    %v202 = vld [vmem:[#allocation2 + $0x560] sm:$0xff]
    %v203 = vld [vmem:[#allocation2 + $0x568] sm:$0xff]
    %v204 = vld [vmem:[#allocation2 + $0x570] sm:$0xff]
    %v205 = vld [vmem:[#allocation2 + $0x578] sm:$0xff]
    %v206 = vld [vmem:[#allocation2 + $0x580] sm:$0xff]
    %v207 = vld [vmem:[#allocation2 + $0x588] sm:$0xff]
    %v208 = vld [vmem:[#allocation2 + $0x590] sm:$0xff]
    %v209 = vld [vmem:[#allocation2 + $0x598] sm:$0xff]
    %v210 = vld [vmem:[#allocation2 + $0x5a0] sm:$0xff]
    %v211 = vld [vmem:[#allocation2 + $0x5a8] sm:$0xff]
    %v212 = vld [vmem:[#allocation2 + $0x5b0] sm:$0xff]
    %v213 = vld [vmem:[#allocation2 + $0x5b8] sm:$0xff]
    %v214 = vld [vmem:[#allocation2 + $0x5c0] sm:$0xff]
    %v215 = vld [vmem:[#allocation2 + $0x5c8] sm:$0xff]
    %v216 = vld [vmem:[#allocation2 + $0x5d0] sm:$0xff]
    %v217 = vld [vmem:[#allocation2 + $0x5d8] sm:$0xff]
    %v218 = vld [vmem:[#allocation2 + $0x5e0] sm:$0xff]
    %v219 = vld [vmem:[#allocation2 + $0x5e8] sm:$0xff]
    %v220 = vld [vmem:[#allocation2 + $0x5f0] sm:$0xff]
    %v221 = vld [vmem:[#allocation2 + $0x5f8] sm:$0xff]
    %v222 = vld [vmem:[#allocation2 + $0x600] sm:$0xff]
    %v223 = vld [vmem:[#allocation2 + $0x608] sm:$0xff]
    %v224 = vld [vmem:[#allocation2 + $0x610] sm:$0xff]
    %v225 = vld [vmem:[#allocation2 + $0x618] sm:$0xff]
    %v226 = vld [vmem:[#allocation2 + $0x620] sm:$0xff]
    %v227 = vld [vmem:[#allocation2 + $0x628] sm:$0xff]
    %v228 = vld [vmem:[#allocation2 + $0x630] sm:$0xff]
    %v229 = vld [vmem:[#allocation2 + $0x638] sm:$0xff]
    %v230 = vld [vmem:[#allocation2 + $0x640] sm:$0xff]
    %v231 = vld [vmem:[#allocation2 + $0x648] sm:$0xff]
    %v232 = vld [vmem:[#allocation2 + $0x650] sm:$0xff]
    %v233 = vld [vmem:[#allocation2 + $0x658] sm:$0xff]
    %v234 = vld [vmem:[#allocation2 + $0x660] sm:$0xff]
    %v235 = vld [vmem:[#allocation2 + $0x668] sm:$0xff]
    %v236 = vld [vmem:[#allocation2 + $0x670] sm:$0xff]
    %v237 = vld [vmem:[#allocation2 + $0x678] sm:$0xff]
    %v238 = vld [vmem:[#allocation2 + $0x680] sm:$0xff]
    %v239 = vld [vmem:[#allocation2 + $0x688] sm:$0xff]
    %v240 = vld [vmem:[#allocation2 + $0x690] sm:$0xff]
    %v241 = vld [vmem:[#allocation2 + $0x698] sm:$0xff]
    %v242 = vld [vmem:[#allocation2 + $0x6a0] sm:$0xff]
    %v243 = vld [vmem:[#allocation2 + $0x6a8] sm:$0xff]
    %v244 = vld [vmem:[#allocation2 + $0x6b0] sm:$0xff]
    %v245 = vld [vmem:[#allocation2 + $0x6b8] sm:$0xff]
    %v246 = vld [vmem:[#allocation2 + $0x6c0] sm:$0xff]
    %v247 = vld [vmem:[#allocation2 + $0x6c8] sm:$0xff]
    %v248 = vld [vmem:[#allocation2 + $0x6d0] sm:$0xff]
    %v249 = vld [vmem:[#allocation2 + $0x6d8] sm:$0xff]
    %v250 = vld [vmem:[#allocation2 + $0x6e0] sm:$0xff]
    %v251 = vld [vmem:[#allocation2 + $0x6e8] sm:$0xff]
    %v252 = vld [vmem:[#allocation2 + $0x6f0] sm:$0xff]
    %v253 = vld [vmem:[#allocation2 + $0x6f8] sm:$0xff]
    %v254 = vld [vmem:[#allocation2 + $0x700] sm:$0xff]
    %v255 = vld [vmem:[#allocation2 + $0x708] sm:$0xff]
    %v256 = vld [vmem:[#allocation2 + $0x710] sm:$0xff]
    %v257 = vld [vmem:[#allocation2 + $0x718] sm:$0xff]
    %v258 = vld [vmem:[#allocation2 + $0x720] sm:$0xff]
    %v259 = vld [vmem:[#allocation2 + $0x728] sm:$0xff]
    %v260 = vld [vmem:[#allocation2 + $0x730] sm:$0xff]
    %v261 = vld [vmem:[#allocation2 + $0x738] sm:$0xff]
    %v262 = vld [vmem:[#allocation2 + $0x740] sm:$0xff]
    %v263 = vld [vmem:[#allocation2 + $0x748] sm:$0xff]
    %v264 = vld [vmem:[#allocation2 + $0x750] sm:$0xff]
    %v265 = vld [vmem:[#allocation2 + $0x758] sm:$0xff]
    %v266 = vld [vmem:[#allocation2 + $0x760] sm:$0xff]
    %v267 = vld [vmem:[#allocation2 + $0x768] sm:$0xff]
    %v268 = vld [vmem:[#allocation2 + $0x770] sm:$0xff]
    %v269 = vld [vmem:[#allocation2 + $0x778] sm:$0xff]
    %v270 = vld [vmem:[#allocation2 + $0x780] sm:$0xff]
    %v271 = vld [vmem:[#allocation2 + $0x788] sm:$0xff]
    %v272 = vld [vmem:[#allocation2 + $0x790] sm:$0xff]
    %v273 = vld [vmem:[#allocation2 + $0x798] sm:$0xff]
    %v274 = vld [vmem:[#allocation2 + $0x7a0] sm:$0xff]
    %v275 = vld [vmem:[#allocation2 + $0x7a8] sm:$0xff]
    %v276 = vld [vmem:[#allocation2 + $0x7b0] sm:$0xff]
    %v277 = vld [vmem:[#allocation2 + $0x7b8] sm:$0xff]
    %v278 = vld [vmem:[#allocation2 + $0x7c0] sm:$0xff]
    %v279 = vld [vmem:[#allocation2 + $0x7c8] sm:$0xff]
    %v280 = vld [vmem:[#allocation2 + $0x7d0] sm:$0xff]
    %v281 = vld [vmem:[#allocation2 + $0x7d8] sm:$0xff]
    %v282 = vld [vmem:[#allocation2 + $0x7e0] sm:$0xff]
    %v283 = vld [vmem:[#allocation2 + $0x7e8] sm:$0xff]
    %v284 = vld [vmem:[#allocation2 + $0x7f0] sm:$0xff]
    %v285 = vld [vmem:[#allocation2 + $0x7f8] sm:$0xff]
    %v286 = vld [vmem:[%s2] sm:$0x1]
    %v289 = vlaneseq
    %v290 = vshrl.u32 %v289, 7
    %v291 = vsub.s32 0, %v290
    %v292 = vrot.slane %v28, %v291
    %v293 = vlaneseq
    %v294 = vshrl.u32 %v293, 7
    %v295 = vsub.s32 1, %v294
    %v296 = vrot.slane %v28, %v295
    %v297 = vlaneseq
    %v298 = vshrl.u32 %v297, 7
    %v299 = vsub.s32 2, %v298
    %v300 = vrot.slane %v28, %v299
    %v301 = vlaneseq
    %v302 = vshrl.u32 %v301, 7
    %v303 = vsub.s32 3, %v302
    %v304 = vrot.slane %v28, %v303
    %v305 = vlaneseq
    %v306 = vshrl.u32 %v305, 7
    %v307 = vsub.s32 4, %v306
    %v308 = vrot.slane %v28, %v307
    %v309 = vlaneseq
    %v310 = vshrl.u32 %v309, 7
    %v311 = vsub.s32 5, %v310
    %v312 = vrot.slane %v28, %v311
    %v313 = vlaneseq
    %v314 = vshrl.u32 %v313, 7
    %v315 = vsub.s32 6, %v314
    %v316 = vrot.slane %v28, %v315
    %v317 = vlaneseq
    %v318 = vshrl.u32 %v317, 7
    %v319 = vsub.s32 7, %v318
    %v320 = vrot.slane %v28, %v319
    %v321 = vlaneseq
    %v322 = vshrl.u32 %v321, 7
    %v323 = vsub.s32 0, %v322
    %v324 = vrot.slane %v29, %v323
    %v325 = vlaneseq
    %v326 = vshrl.u32 %v325, 7
    %v327 = vsub.s32 1, %v326
    %v328 = vrot.slane %v29, %v327
    %v329 = vlaneseq
    %v330 = vshrl.u32 %v329, 7
    %v331 = vsub.s32 2, %v330
    %v332 = vrot.slane %v29, %v331
    %v333 = vlaneseq
    %v334 = vshrl.u32 %v333, 7
    %v335 = vsub.s32 3, %v334
    %v336 = vrot.slane %v29, %v335
    %v337 = vlaneseq
    %v338 = vshrl.u32 %v337, 7
    %v339 = vsub.s32 4, %v338
    %v340 = vrot.slane %v29, %v339
    %v341 = vlaneseq
    %v342 = vshrl.u32 %v341, 7
    %v343 = vsub.s32 5, %v342
    %v344 = vrot.slane %v29, %v343
    %v345 = vlaneseq
    %v346 = vshrl.u32 %v345, 7
    %v347 = vsub.s32 6, %v346
    %v348 = vrot.slane %v29, %v347
    %v349 = vlaneseq
    %v350 = vshrl.u32 %v349, 7
    %v351 = vsub.s32 7, %v350
    %v352 = vrot.slane %v29, %v351
    %369 = vmatprep.subr.mxu0 0.0
    %370 = vmatpush1.msra.mxu0 %v30
    %371 = vmatprep.subr.mxu0 0.0
    %372 = vmatpush1.msra.mxu0 %v31
    %373 = vmatprep.subr.mxu0 0.0
    %374 = vmatpush1.msra.mxu0 %v32
    %375 = vmatprep.subr.mxu0 0.0
    %376 = vmatpush1.msra.mxu0 %v33
    %377 = vmatprep.subr.mxu0 0.0
    %378 = vmatpush1.msra.mxu0 %v34
    %379 = vmatprep.subr.mxu0 0.0
    %380 = vmatpush1.msra.mxu0 %v35
    %381 = vmatprep.subr.mxu0 0.0
    %382 = vmatpush1.msra.mxu0 %v36
    %383 = vmatprep.subr.mxu0 0.0
    %384 = vmatpush1.msra.mxu0 %v37
    %385 = vmatprep.subr.mxu0 0.0
    %386 = vmatpush1.msra.mxu0 %v38
    %387 = vmatprep.subr.mxu0 0.0
    %388 = vmatpush1.msra.mxu0 %v39
    %389 = vmatprep.subr.mxu0 0.0
    %390 = vmatpush1.msra.mxu0 %v40
    %391 = vmatprep.subr.mxu0 0.0
    %392 = vmatpush1.msra.mxu0 %v41
    %393 = vmatprep.subr.mxu0 0.0
    %394 = vmatpush1.msra.mxu0 %v42
    %395 = vmatprep.subr.mxu0 0.0
    %396 = vmatpush1.msra.mxu0 %v43
    %397 = vmatprep.subr.mxu0 0.0
    %398 = vmatpush1.msra.mxu0 %v44
    %399 = vmatprep.subr.mxu0 0.0
    %400 = vmatpush1.msra.mxu0 %v45
    %401 = vmatprep.subr.mxu0 0.0
    %402 = vmatpush1.msra.mxu0 %v46
    %403 = vmatprep.subr.mxu0 0.0
    %404 = vmatpush1.msra.mxu0 %v47
    %405 = vmatprep.subr.mxu0 0.0
    %406 = vmatpush1.msra.mxu0 %v48
    %407 = vmatprep.subr.mxu0 0.0
    %408 = vmatpush1.msra.mxu0 %v49
    %409 = vmatprep.subr.mxu0 0.0
    %410 = vmatpush1.msra.mxu0 %v50
    %411 = vmatprep.subr.mxu0 0.0
    %412 = vmatpush1.msra.mxu0 %v51
    %413 = vmatprep.subr.mxu0 0.0
    %414 = vmatpush1.msra.mxu0 %v52
    %415 = vmatprep.subr.mxu0 0.0
    %416 = vmatpush1.msra.mxu0 %v53
    %417 = vmatprep.subr.mxu0 0.0
    %418 = vmatpush1.msra.mxu0 %v54
    %419 = vmatprep.subr.mxu0 0.0
    %420 = vmatpush1.msra.mxu0 %v55
    %421 = vmatprep.subr.mxu0 0.0
    %422 = vmatpush1.msra.mxu0 %v56
    %423 = vmatprep.subr.mxu0 0.0
    %424 = vmatpush1.msra.mxu0 %v57
    %425 = vmatprep.subr.mxu0 0.0
    %426 = vmatpush1.msra.mxu0 %v58
    %427 = vmatprep.subr.mxu0 0.0
    %428 = vmatpush1.msra.mxu0 %v59
    %429 = vmatprep.subr.mxu0 0.0
    %430 = vmatpush1.msra.mxu0 %v60
    %431 = vmatprep.subr.mxu0 0.0
    %432 = vmatpush1.msra.mxu0 %v61
    %433 = vmatprep.mubr.f32.mxu0 %v296
    %434 = vmatmul.mubr.f32.gmra.mrb[0].mxu0 %v292
    %v435 = vpop.f32.mrb[0].mxu0
    %v436 = vadd.f32 %v286, %v435
    %v437 = vpop.f32.mrb[0].mxu0
    %438 = vdwg.mxu0
    %439 = vmatprep.subr.mxu0 0.0
    %440 = vmatpush1.msra.mxu0 %v62
    %441 = vmatprep.subr.mxu0 0.0
    %442 = vmatpush1.msra.mxu0 %v63
    %443 = vmatprep.subr.mxu0 0.0
    %444 = vmatpush1.msra.mxu0 %v64
    %445 = vmatprep.subr.mxu0 0.0
    %446 = vmatpush1.msra.mxu0 %v65
    %447 = vmatprep.subr.mxu0 0.0
    %448 = vmatpush1.msra.mxu0 %v66
    %449 = vmatprep.subr.mxu0 0.0
    %450 = vmatpush1.msra.mxu0 %v67
    %451 = vmatprep.subr.mxu0 0.0
    %452 = vmatpush1.msra.mxu0 %v68
    %453 = vmatprep.subr.mxu0 0.0
    %454 = vmatpush1.msra.mxu0 %v69
    %455 = vmatprep.subr.mxu0 0.0
    %456 = vmatpush1.msra.mxu0 %v70
    %457 = vmatprep.subr.mxu0 0.0
    %458 = vmatpush1.msra.mxu0 %v71
    %459 = vmatprep.subr.mxu0 0.0
    %460 = vmatpush1.msra.mxu0 %v72
    %461 = vmatprep.subr.mxu0 0.0
    %462 = vmatpush1.msra.mxu0 %v73
    %463 = vmatprep.subr.mxu0 0.0
    %464 = vmatpush1.msra.mxu0 %v74
    %465 = vmatprep.subr.mxu0 0.0
    %466 = vmatpush1.msra.mxu0 %v75
    %467 = vmatprep.subr.mxu0 0.0
    %468 = vmatpush1.msra.mxu0 %v76
    %469 = vmatprep.subr.mxu0 0.0
    %470 = vmatpush1.msra.mxu0 %v77
    %471 = vmatprep.subr.mxu0 0.0
    %472 = vmatpush1.msra.mxu0 %v78
    %473 = vmatprep.subr.mxu0 0.0
    %474 = vmatpush1.msra.mxu0 %v79
    %475 = vmatprep.subr.mxu0 0.0
    %476 = vmatpush1.msra.mxu0 %v80
    %477 = vmatprep.subr.mxu0 0.0
    %478 = vmatpush1.msra.mxu0 %v81
    %479 = vmatprep.subr.mxu0 0.0
    %480 = vmatpush1.msra.mxu0 %v82
    %481 = vmatprep.subr.mxu0 0.0
    %482 = vmatpush1.msra.mxu0 %v83
    %483 = vmatprep.subr.mxu0 0.0
    %484 = vmatpush1.msra.mxu0 %v84
    %485 = vmatprep.subr.mxu0 0.0
    %486 = vmatpush1.msra.mxu0 %v85
    %487 = vmatprep.subr.mxu0 0.0
    %488 = vmatpush1.msra.mxu0 %v86
    %489 = vmatprep.subr.mxu0 0.0
    %490 = vmatpush1.msra.mxu0 %v87
    %491 = vmatprep.subr.mxu0 0.0
    %492 = vmatpush1.msra.mxu0 %v88
    %493 = vmatprep.subr.mxu0 0.0
    %494 = vmatpush1.msra.mxu0 %v89
    %495 = vmatprep.subr.mxu0 0.0
    %496 = vmatpush1.msra.mxu0 %v90
    %497 = vmatprep.subr.mxu0 0.0
    %498 = vmatpush1.msra.mxu0 %v91
    %499 = vmatprep.subr.mxu0 0.0
    %500 = vmatpush1.msra.mxu0 %v92
    %501 = vmatprep.subr.mxu0 0.0
    %502 = vmatpush1.msra.mxu0 %v93
    %503 = vmatprep.mubr.f32.mxu0 %v304
    %504 = vmatmul.mubr.f32.gmra.mrb[0].mxu0 %v300
    %v505 = vpop.f32.mrb[0].mxu0
    %v506 = vadd.f32 %v436, %v505
    %v507 = vpop.f32.mrb[0].mxu0
    %508 = vdwg.mxu0
    %509 = vmatprep.subr.mxu0 0.0
    %510 = vmatpush1.msra.mxu0 %v94
    %511 = vmatprep.subr.mxu0 0.0
    %512 = vmatpush1.msra.mxu0 %v95
    %513 = vmatprep.subr.mxu0 0.0
    %514 = vmatpush1.msra.mxu0 %v96
    %515 = vmatprep.subr.mxu0 0.0
    %516 = vmatpush1.msra.mxu0 %v97
    %517 = vmatprep.subr.mxu0 0.0
    %518 = vmatpush1.msra.mxu0 %v98
    %519 = vmatprep.subr.mxu0 0.0
    %520 = vmatpush1.msra.mxu0 %v99
    %521 = vmatprep.subr.mxu0 0.0
    %522 = vmatpush1.msra.mxu0 %v100
    %523 = vmatprep.subr.mxu0 0.0
    %524 = vmatpush1.msra.mxu0 %v101
    %525 = vmatprep.subr.mxu0 0.0
    %526 = vmatpush1.msra.mxu0 %v102
    %527 = vmatprep.subr.mxu0 0.0
    %528 = vmatpush1.msra.mxu0 %v103
    %529 = vmatprep.subr.mxu0 0.0
    %530 = vmatpush1.msra.mxu0 %v104
    %531 = vmatprep.subr.mxu0 0.0
    %532 = vmatpush1.msra.mxu0 %v105
    %533 = vmatprep.subr.mxu0 0.0
    %534 = vmatpush1.msra.mxu0 %v106
    %535 = vmatprep.subr.mxu0 0.0
    %536 = vmatpush1.msra.mxu0 %v107
    %537 = vmatprep.subr.mxu0 0.0
    %538 = vmatpush1.msra.mxu0 %v108
    %539 = vmatprep.subr.mxu0 0.0
    %540 = vmatpush1.msra.mxu0 %v109
    %541 = vmatprep.subr.mxu0 0.0
    %542 = vmatpush1.msra.mxu0 %v110
    %543 = vmatprep.subr.mxu0 0.0
    %544 = vmatpush1.msra.mxu0 %v111
    %545 = vmatprep.subr.mxu0 0.0
    %546 = vmatpush1.msra.mxu0 %v112
    %547 = vmatprep.subr.mxu0 0.0
    %548 = vmatpush1.msra.mxu0 %v113
    %549 = vmatprep.subr.mxu0 0.0
    %550 = vmatpush1.msra.mxu0 %v114
    %551 = vmatprep.subr.mxu0 0.0
    %552 = vmatpush1.msra.mxu0 %v115
    %553 = vmatprep.subr.mxu0 0.0
    %554 = vmatpush1.msra.mxu0 %v116
    %555 = vmatprep.subr.mxu0 0.0
    %556 = vmatpush1.msra.mxu0 %v117
    %557 = vmatprep.subr.mxu0 0.0
    %558 = vmatpush1.msra.mxu0 %v118
    %559 = vmatprep.subr.mxu0 0.0
    %560 = vmatpush1.msra.mxu0 %v119
    %561 = vmatprep.subr.mxu0 0.0
    %562 = vmatpush1.msra.mxu0 %v120
    %563 = vmatprep.subr.mxu0 0.0
    %564 = vmatpush1.msra.mxu0 %v121
    %565 = vmatprep.subr.mxu0 0.0
    %566 = vmatpush1.msra.mxu0 %v122
    %567 = vmatprep.subr.mxu0 0.0
    %568 = vmatpush1.msra.mxu0 %v123
    %569 = vmatprep.subr.mxu0 0.0
    %570 = vmatpush1.msra.mxu0 %v124
    %571 = vmatprep.subr.mxu0 0.0
    %572 = vmatpush1.msra.mxu0 %v125
    %573 = vmatprep.mubr.f32.mxu0 %v312
    %574 = vmatmul.mubr.f32.gmra.mrb[0].mxu0 %v308
    %v575 = vpop.f32.mrb[0].mxu0
    %v576 = vadd.f32 %v506, %v575
    %v577 = vpop.f32.mrb[0].mxu0
    %578 = vdwg.mxu0
    %579 = vmatprep.subr.mxu0 0.0
    %580 = vmatpush1.msra.mxu0 %v126
    %581 = vmatprep.subr.mxu0 0.0
    %582 = vmatpush1.msra.mxu0 %v127
    %583 = vmatprep.subr.mxu0 0.0
    %584 = vmatpush1.msra.mxu0 %v128
    %585 = vmatprep.subr.mxu0 0.0
    %586 = vmatpush1.msra.mxu0 %v129
    %587 = vmatprep.subr.mxu0 0.0
    %588 = vmatpush1.msra.mxu0 %v130
    %589 = vmatprep.subr.mxu0 0.0
    %590 = vmatpush1.msra.mxu0 %v131
    %591 = vmatprep.subr.mxu0 0.0
    %592 = vmatpush1.msra.mxu0 %v132
    %593 = vmatprep.subr.mxu0 0.0
    %594 = vmatpush1.msra.mxu0 %v133
    %595 = vmatprep.subr.mxu0 0.0
    %596 = vmatpush1.msra.mxu0 %v134
    %597 = vmatprep.subr.mxu0 0.0
    %598 = vmatpush1.msra.mxu0 %v135
    %599 = vmatprep.subr.mxu0 0.0
    %600 = vmatpush1.msra.mxu0 %v136
    %601 = vmatprep.subr.mxu0 0.0
    %602 = vmatpush1.msra.mxu0 %v137
    %603 = vmatprep.subr.mxu0 0.0
    %604 = vmatpush1.msra.mxu0 %v138
    %605 = vmatprep.subr.mxu0 0.0
    %606 = vmatpush1.msra.mxu0 %v139
    %607 = vmatprep.subr.mxu0 0.0
    %608 = vmatpush1.msra.mxu0 %v140
    %609 = vmatprep.subr.mxu0 0.0
    %610 = vmatpush1.msra.mxu0 %v141
    %611 = vmatprep.subr.mxu0 0.0
    %612 = vmatpush1.msra.mxu0 %v142
    %613 = vmatprep.subr.mxu0 0.0
    %614 = vmatpush1.msra.mxu0 %v143
    %615 = vmatprep.subr.mxu0 0.0
    %616 = vmatpush1.msra.mxu0 %v144
    %617 = vmatprep.subr.mxu0 0.0
    %618 = vmatpush1.msra.mxu0 %v145
    %619 = vmatprep.subr.mxu0 0.0
    %620 = vmatpush1.msra.mxu0 %v146
    %621 = vmatprep.subr.mxu0 0.0
    %622 = vmatpush1.msra.mxu0 %v147
    %623 = vmatprep.subr.mxu0 0.0
    %624 = vmatpush1.msra.mxu0 %v148
    %625 = vmatprep.subr.mxu0 0.0
    %626 = vmatpush1.msra.mxu0 %v149
    %627 = vmatprep.subr.mxu0 0.0
    %628 = vmatpush1.msra.mxu0 %v150
    %629 = vmatprep.subr.mxu0 0.0
    %630 = vmatpush1.msra.mxu0 %v151
    %631 = vmatprep.subr.mxu0 0.0
    %632 = vmatpush1.msra.mxu0 %v152
    %633 = vmatprep.subr.mxu0 0.0
    %634 = vmatpush1.msra.mxu0 %v153
    %635 = vmatprep.subr.mxu0 0.0
    %636 = vmatpush1.msra.mxu0 %v154
    %637 = vmatprep.subr.mxu0 0.0
    %638 = vmatpush1.msra.mxu0 %v155
    %639 = vmatprep.subr.mxu0 0.0
    %640 = vmatpush1.msra.mxu0 %v156
    %641 = vmatprep.subr.mxu0 0.0
    %642 = vmatpush1.msra.mxu0 %v157
    %643 = vmatprep.mubr.f32.mxu0 %v320
    %644 = vmatmul.mubr.f32.gmra.mrb[0].mxu0 %v316
    %v645 = vpop.f32.mrb[0].mxu0
    %v646 = vadd.f32 %v576, %v645
    %v647 = vpop.f32.mrb[0].mxu0
    %648 = vdwg.mxu0
    %649 = vmatprep.subr.mxu0 0.0
    %650 = vmatpush1.msra.mxu0 %v158
    %651 = vmatprep.subr.mxu0 0.0
    %652 = vmatpush1.msra.mxu0 %v159
    %653 = vmatprep.subr.mxu0 0.0
    %654 = vmatpush1.msra.mxu0 %v160
    %655 = vmatprep.subr.mxu0 0.0
    %656 = vmatpush1.msra.mxu0 %v161
    %657 = vmatprep.subr.mxu0 0.0
    %658 = vmatpush1.msra.mxu0 %v162
    %659 = vmatprep.subr.mxu0 0.0
    %660 = vmatpush1.msra.mxu0 %v163
    %661 = vmatprep.subr.mxu0 0.0
    %662 = vmatpush1.msra.mxu0 %v164
    %663 = vmatprep.subr.mxu0 0.0
    %664 = vmatpush1.msra.mxu0 %v165
    %665 = vmatprep.subr.mxu0 0.0
    %666 = vmatpush1.msra.mxu0 %v166
    %667 = vmatprep.subr.mxu0 0.0
    %668 = vmatpush1.msra.mxu0 %v167
    %669 = vmatprep.subr.mxu0 0.0
    %670 = vmatpush1.msra.mxu0 %v168
    %671 = vmatprep.subr.mxu0 0.0
    %672 = vmatpush1.msra.mxu0 %v169
    %673 = vmatprep.subr.mxu0 0.0
    %674 = vmatpush1.msra.mxu0 %v170
    %675 = vmatprep.subr.mxu0 0.0
    %676 = vmatpush1.msra.mxu0 %v171
    %677 = vmatprep.subr.mxu0 0.0
    %678 = vmatpush1.msra.mxu0 %v172
    %679 = vmatprep.subr.mxu0 0.0
    %680 = vmatpush1.msra.mxu0 %v173
    %681 = vmatprep.subr.mxu0 0.0
    %682 = vmatpush1.msra.mxu0 %v174
    %683 = vmatprep.subr.mxu0 0.0
    %684 = vmatpush1.msra.mxu0 %v175
    %685 = vmatprep.subr.mxu0 0.0
    %686 = vmatpush1.msra.mxu0 %v176
    %687 = vmatprep.subr.mxu0 0.0
    %688 = vmatpush1.msra.mxu0 %v177
    %689 = vmatprep.subr.mxu0 0.0
    %690 = vmatpush1.msra.mxu0 %v178
    %691 = vmatprep.subr.mxu0 0.0
    %692 = vmatpush1.msra.mxu0 %v179
    %693 = vmatprep.subr.mxu0 0.0
    %694 = vmatpush1.msra.mxu0 %v180
    %695 = vmatprep.subr.mxu0 0.0
    %696 = vmatpush1.msra.mxu0 %v181
    %697 = vmatprep.subr.mxu0 0.0
    %698 = vmatpush1.msra.mxu0 %v182
    %699 = vmatprep.subr.mxu0 0.0
    %700 = vmatpush1.msra.mxu0 %v183
    %701 = vmatprep.subr.mxu0 0.0
    %702 = vmatpush1.msra.mxu0 %v184
    %703 = vmatprep.subr.mxu0 0.0
    %704 = vmatpush1.msra.mxu0 %v185
    %705 = vmatprep.subr.mxu0 0.0
    %706 = vmatpush1.msra.mxu0 %v186
    %707 = vmatprep.subr.mxu0 0.0
    %708 = vmatpush1.msra.mxu0 %v187
    %709 = vmatprep.subr.mxu0 0.0
    %710 = vmatpush1.msra.mxu0 %v188
    %711 = vmatprep.subr.mxu0 0.0
    %712 = vmatpush1.msra.mxu0 %v189
    %713 = vmatprep.mubr.f32.mxu0 %v328
    %714 = vmatmul.mubr.f32.gmra.mrb[0].mxu0 %v324
    %v715 = vpop.f32.mrb[0].mxu0
    %v716 = vadd.f32 %v646, %v715
    %v717 = vpop.f32.mrb[0].mxu0
    %718 = vdwg.mxu0
    %719 = vmatprep.subr.mxu0 0.0
    %720 = vmatpush1.msra.mxu0 %v190
    %721 = vmatprep.subr.mxu0 0.0
    %722 = vmatpush1.msra.mxu0 %v191
    %723 = vmatprep.subr.mxu0 0.0
    %724 = vmatpush1.msra.mxu0 %v192
    %725 = vmatprep.subr.mxu0 0.0
    %726 = vmatpush1.msra.mxu0 %v193
    %727 = vmatprep.subr.mxu0 0.0
    %728 = vmatpush1.msra.mxu0 %v194
    %729 = vmatprep.subr.mxu0 0.0
    %730 = vmatpush1.msra.mxu0 %v195
    %731 = vmatprep.subr.mxu0 0.0
    %732 = vmatpush1.msra.mxu0 %v196
    %733 = vmatprep.subr.mxu0 0.0
    %734 = vmatpush1.msra.mxu0 %v197
    %735 = vmatprep.subr.mxu0 0.0
    %736 = vmatpush1.msra.mxu0 %v198
    %737 = vmatprep.subr.mxu0 0.0
    %738 = vmatpush1.msra.mxu0 %v199
    %739 = vmatprep.subr.mxu0 0.0
    %740 = vmatpush1.msra.mxu0 %v200
    %741 = vmatprep.subr.mxu0 0.0
    %742 = vmatpush1.msra.mxu0 %v201
    %743 = vmatprep.subr.mxu0 0.0
    %744 = vmatpush1.msra.mxu0 %v202
    %745 = vmatprep.subr.mxu0 0.0
    %746 = vmatpush1.msra.mxu0 %v203
    %747 = vmatprep.subr.mxu0 0.0
    %748 = vmatpush1.msra.mxu0 %v204
    %749 = vmatprep.subr.mxu0 0.0
    %750 = vmatpush1.msra.mxu0 %v205
    %751 = vmatprep.subr.mxu0 0.0
    %752 = vmatpush1.msra.mxu0 %v206
    %753 = vmatprep.subr.mxu0 0.0
    %754 = vmatpush1.msra.mxu0 %v207
    %755 = vmatprep.subr.mxu0 0.0
    %756 = vmatpush1.msra.mxu0 %v208
    %757 = vmatprep.subr.mxu0 0.0
    %758 = vmatpush1.msra.mxu0 %v209
    %759 = vmatprep.subr.mxu0 0.0
    %760 = vmatpush1.msra.mxu0 %v210
    %761 = vmatprep.subr.mxu0 0.0
    %762 = vmatpush1.msra.mxu0 %v211
    %763 = vmatprep.subr.mxu0 0.0
    %764 = vmatpush1.msra.mxu0 %v212
    %765 = vmatprep.subr.mxu0 0.0
    %766 = vmatpush1.msra.mxu0 %v213
    %767 = vmatprep.subr.mxu0 0.0
    %768 = vmatpush1.msra.mxu0 %v214
    %769 = vmatprep.subr.mxu0 0.0
    %770 = vmatpush1.msra.mxu0 %v215
    %771 = vmatprep.subr.mxu0 0.0
    %772 = vmatpush1.msra.mxu0 %v216
    %773 = vmatprep.subr.mxu0 0.0
    %774 = vmatpush1.msra.mxu0 %v217
    %775 = vmatprep.subr.mxu0 0.0
    %776 = vmatpush1.msra.mxu0 %v218
    %777 = vmatprep.subr.mxu0 0.0
    %778 = vmatpush1.msra.mxu0 %v219
    %779 = vmatprep.subr.mxu0 0.0
    %780 = vmatpush1.msra.mxu0 %v220
    %781 = vmatprep.subr.mxu0 0.0
    %782 = vmatpush1.msra.mxu0 %v221
    %783 = vmatprep.mubr.f32.mxu0 %v336
    %784 = vmatmul.mubr.f32.gmra.mrb[0].mxu0 %v332
    %v785 = vpop.f32.mrb[0].mxu0
    %v786 = vadd.f32 %v716, %v785
    %v787 = vpop.f32.mrb[0].mxu0
    %788 = vdwg.mxu0
    %789 = vmatprep.subr.mxu0 0.0
    %790 = vmatpush1.msra.mxu0 %v222
    %791 = vmatprep.subr.mxu0 0.0
    %792 = vmatpush1.msra.mxu0 %v223
    %793 = vmatprep.subr.mxu0 0.0
    %794 = vmatpush1.msra.mxu0 %v224
    %795 = vmatprep.subr.mxu0 0.0
    %796 = vmatpush1.msra.mxu0 %v225
    %797 = vmatprep.subr.mxu0 0.0
    %798 = vmatpush1.msra.mxu0 %v226
    %799 = vmatprep.subr.mxu0 0.0
    %800 = vmatpush1.msra.mxu0 %v227
    %801 = vmatprep.subr.mxu0 0.0
    %802 = vmatpush1.msra.mxu0 %v228
    %803 = vmatprep.subr.mxu0 0.0
    %804 = vmatpush1.msra.mxu0 %v229
    %805 = vmatprep.subr.mxu0 0.0
    %806 = vmatpush1.msra.mxu0 %v230
    %807 = vmatprep.subr.mxu0 0.0
    %808 = vmatpush1.msra.mxu0 %v231
    %809 = vmatprep.subr.mxu0 0.0
    %810 = vmatpush1.msra.mxu0 %v232
    %811 = vmatprep.subr.mxu0 0.0
    %812 = vmatpush1.msra.mxu0 %v233
    %813 = vmatprep.subr.mxu0 0.0
    %814 = vmatpush1.msra.mxu0 %v234
    %815 = vmatprep.subr.mxu0 0.0
    %816 = vmatpush1.msra.mxu0 %v235
    %817 = vmatprep.subr.mxu0 0.0
    %818 = vmatpush1.msra.mxu0 %v236
    %819 = vmatprep.subr.mxu0 0.0
    %820 = vmatpush1.msra.mxu0 %v237
    %821 = vmatprep.subr.mxu0 0.0
    %822 = vmatpush1.msra.mxu0 %v238
    %823 = vmatprep.subr.mxu0 0.0
    %824 = vmatpush1.msra.mxu0 %v239
    %825 = vmatprep.subr.mxu0 0.0
    %826 = vmatpush1.msra.mxu0 %v240
    %827 = vmatprep.subr.mxu0 0.0
    %828 = vmatpush1.msra.mxu0 %v241
    %829 = vmatprep.subr.mxu0 0.0
    %830 = vmatpush1.msra.mxu0 %v242
    %831 = vmatprep.subr.mxu0 0.0
    %832 = vmatpush1.msra.mxu0 %v243
    %833 = vmatprep.subr.mxu0 0.0
    %834 = vmatpush1.msra.mxu0 %v244
    %835 = vmatprep.subr.mxu0 0.0
    %836 = vmatpush1.msra.mxu0 %v245
    %837 = vmatprep.subr.mxu0 0.0
    %838 = vmatpush1.msra.mxu0 %v246
    %839 = vmatprep.subr.mxu0 0.0
    %840 = vmatpush1.msra.mxu0 %v247
    %841 = vmatprep.subr.mxu0 0.0
    %842 = vmatpush1.msra.mxu0 %v248
    %843 = vmatprep.subr.mxu0 0.0
    %844 = vmatpush1.msra.mxu0 %v249
    %845 = vmatprep.subr.mxu0 0.0
    %846 = vmatpush1.msra.mxu0 %v250
    %847 = vmatprep.subr.mxu0 0.0
    %848 = vmatpush1.msra.mxu0 %v251
    %849 = vmatprep.subr.mxu0 0.0
    %850 = vmatpush1.msra.mxu0 %v252
    %851 = vmatprep.subr.mxu0 0.0
    %852 = vmatpush1.msra.mxu0 %v253
    %853 = vmatprep.mubr.f32.mxu0 %v344
    %854 = vmatmul.mubr.f32.gmra.mrb[0].mxu0 %v340
    %v855 = vpop.f32.mrb[0].mxu0
    %v856 = vadd.f32 %v786, %v855
    %v857 = vpop.f32.mrb[0].mxu0
    %858 = vdwg.mxu0
    %859 = vmatprep.subr.mxu0 0.0
    %860 = vmatpush1.msra.mxu0 %v254
    %861 = vmatprep.subr.mxu0 0.0
    %862 = vmatpush1.msra.mxu0 %v255
    %863 = vmatprep.subr.mxu0 0.0
    %864 = vmatpush1.msra.mxu0 %v256
    %865 = vmatprep.subr.mxu0 0.0
    %866 = vmatpush1.msra.mxu0 %v257
    %867 = vmatprep.subr.mxu0 0.0
    %868 = vmatpush1.msra.mxu0 %v258
    %869 = vmatprep.subr.mxu0 0.0
    %870 = vmatpush1.msra.mxu0 %v259
    %871 = vmatprep.subr.mxu0 0.0
    %872 = vmatpush1.msra.mxu0 %v260
    %873 = vmatprep.subr.mxu0 0.0
    %874 = vmatpush1.msra.mxu0 %v261
    %875 = vmatprep.subr.mxu0 0.0
    %876 = vmatpush1.msra.mxu0 %v262
    %877 = vmatprep.subr.mxu0 0.0
    %878 = vmatpush1.msra.mxu0 %v263
    %879 = vmatprep.subr.mxu0 0.0
    %880 = vmatpush1.msra.mxu0 %v264
    %881 = vmatprep.subr.mxu0 0.0
    %882 = vmatpush1.msra.mxu0 %v265
    %883 = vmatprep.subr.mxu0 0.0
    %884 = vmatpush1.msra.mxu0 %v266
    %885 = vmatprep.subr.mxu0 0.0
    %886 = vmatpush1.msra.mxu0 %v267
    %887 = vmatprep.subr.mxu0 0.0
    %888 = vmatpush1.msra.mxu0 %v268
    %889 = vmatprep.subr.mxu0 0.0
    %890 = vmatpush1.msra.mxu0 %v269
    %891 = vmatprep.subr.mxu0 0.0
    %892 = vmatpush1.msra.mxu0 %v270
    %893 = vmatprep.subr.mxu0 0.0
    %894 = vmatpush1.msra.mxu0 %v271
    %895 = vmatprep.subr.mxu0 0.0
    %896 = vmatpush1.msra.mxu0 %v272
    %897 = vmatprep.subr.mxu0 0.0
    %898 = vmatpush1.msra.mxu0 %v273
    %899 = vmatprep.subr.mxu0 0.0
    %900 = vmatpush1.msra.mxu0 %v274
    %901 = vmatprep.subr.mxu0 0.0
    %902 = vmatpush1.msra.mxu0 %v275
    %903 = vmatprep.subr.mxu0 0.0
    %904 = vmatpush1.msra.mxu0 %v276
    %905 = vmatprep.subr.mxu0 0.0
    %906 = vmatpush1.msra.mxu0 %v277
    %907 = vmatprep.subr.mxu0 0.0
    %908 = vmatpush1.msra.mxu0 %v278
    %909 = vmatprep.subr.mxu0 0.0
    %910 = vmatpush1.msra.mxu0 %v279
    %911 = vmatprep.subr.mxu0 0.0
    %912 = vmatpush1.msra.mxu0 %v280
    %913 = vmatprep.subr.mxu0 0.0
    %914 = vmatpush1.msra.mxu0 %v281
    %915 = vmatprep.subr.mxu0 0.0
    %916 = vmatpush1.msra.mxu0 %v282
    %917 = vmatprep.subr.mxu0 0.0
    %918 = vmatpush1.msra.mxu0 %v283
    %919 = vmatprep.subr.mxu0 0.0
    %920 = vmatpush1.msra.mxu0 %v284
    %921 = vmatprep.subr.mxu0 0.0
    %922 = vmatpush1.msra.mxu0 %v285
    %923 = vmatprep.mubr.f32.mxu0 %v352
    %924 = vmatmul.mubr.f32.gmra.mrb[0].mxu0 %v348
    %v925 = vpop.f32.mrb[0].mxu0
    %v926 = vadd.f32 %v856, %v925
    %v927 = vpop.f32.mrb[0].mxu0
    %928 = vdwg.mxu0
    %929 = vst [vmem:[%s3] sm:$0x1] %v926
    // Predicated region
    $region18: #{flatten_linear_forward.1} parent=1 // pred_check
      _
    $region19: #{flatten_linear_forward.1} parent=1 // pred_check_branch
      %931 = sbr.rel (0) target = $region21
    $region20: #{flatten_linear_forward.1} parent=1 // pred_region
      _
    $region21: #{flatten_linear_forward.1} parent=1 // pred_fallthru
      _
    // Predicated region
    $region22: #{flatten_linear_forward.1} parent=1 // pred_check
      _
    $region23: #{flatten_linear_forward.1} parent=1 // pred_check_branch
      %933 = sbr.rel (0) target = $region25
    $region24: #{flatten_linear_forward.1} parent=1 // pred_region
      _
    $region25: #{flatten_linear_forward.1} parent=1 // pred_fallthru
      _
    %934 = vsyncpa [#allocation3], 1

</llo_original>
